<compile_context>
chip_gen: v5e
topology: v5e:2x2
jax: 0.10.0
libtpu: 0.0.40
codegen_flags: <defaults>
</compile_context>

<pallas_src>
import jax
import jax.numpy as jnp
from jax import lax
from jax.experimental import pallas as pl
from jax.experimental.pallas import tpu as pltpu


CHUNK = 256      # batch rows per inner step (multiple of 128 -> lane-aligned)
TB_MAX = 8192    # max batch-tile (grid-step) size, multiple of CHUNK


def _round_up(n: int, m: int) -> int:
    return ((n + m - 1) // m) * m


def _cdiv(a: int, b: int) -> int:
    return (a + b - 1) // b


def _make_kernel(tb: int, chunk: int):
    """SimpleNet kernel body for one (tb, input_size) batch tile."""
    assert tb % chunk == 0
    n_chunks = tb // chunk

    def kernel(x_ref, w1_ref, b1_ref, w2_ref, b2_ref, w3_ref, b3_ref, o_ref):
        # Hoist weight/bias loads out of the chunk loop (no CSE for broadcasts;
        # these operands are VMEM-resident via constant index_maps).
        w1 = w1_ref[...]      # (h1, in)   -- PyTorch-native (out, in)
        b1 = b1_ref[...]      # (h1, 1)
        w2 = w2_ref[...]      # (h2, h1)
        b2 = b2_ref[...]      # (h2, 1)
        w3 = w3_ref[...]      # (h2, 1)    -- fc3 weight as a column
        b3 = b3_ref[...]      # (1, 1)

        def body(c, carry):
            r = pl.multiple_of(c * chunk, chunk)
            x = x_ref[pl.ds(r, chunk), :]                       # (C, in)
            # fc1: h1T = W1 . xT  (contract feature axis of both operands;
            # MXU with N = chunk -> lane-dense result).
            h1t = lax.dot_general(
                w1, x, (((1,), (1,)), ((), ())),
                preferred_element_type=jnp.float32)             # (h1, C)
            h1t = jnp.maximum(h1t + b1, 0.0)
            # fc2: h2T = W2 . h1T (MXU).
            h2t = jnp.dot(w2, h1t,
                          preferred_element_type=jnp.float32)   # (h2, C)
            h2t = jnp.maximum(h2t + b2, 0.0)
            # fc3 (output width 1): VPU multiply + cross-sublane sum -> (1, C).
            o = jnp.sum(h2t * w3, axis=0, keepdims=True) + b3
            # Lane-dense, lane-aligned store into the (1, tb) output row.
            o_ref[:, pl.ds(r, chunk)] = o.astype(o_ref.dtype)
            return carry

        lax.fori_loop(0, n_chunks, body, 0, unroll=(n_chunks <= 2))

    return kernel


@jax.jit
def simplenet_forward(x, params):
    """x: (B, input_size) f32. params in PyTorch nn.Linear layout:
    w*: (out_features, in_features), b*: (out_features,)."""
    w1, w2, w3 = params["w1"], params["w2"], params["w3"]
    b1 = params["b1"].reshape(-1, 1)         # (h1, 1)
    b2 = params["b2"].reshape(-1, 1)         # (h2, 1)
    b3 = params["b3"].reshape(1, 1)          # (1, 1)
    w3c = w3.reshape(-1, 1)                  # (h2, 1) column for the VPU path

    B, input_size = x.shape
    h1_dim = w1.shape[0]
    h2_dim = w2.shape[0]

    # ---- batch tiling ----------------------------------------------------
    b0 = _round_up(max(B, 1), CHUNK)
    if b0 <= CHUNK:
        steps = 1                             # tiny batch: one tile
    else:
        steps = max(_cdiv(b0, TB_MAX), 2)     # >=2 steps -> megacore on v7x
    tb = _round_up(_cdiv(b0, steps), CHUNK)   # multiple of CHUNK, <= TB_MAX
    b_pad = steps * tb
    if b_pad != B:
        x = jnp.pad(x, ((0, b_pad - B), (0, 0)))   # zero rows, sliced off below
    grid = (steps,)

    kernel = _make_kernel(tb, CHUNK)

    const2 = lambda i: (0, 0)
    flops = 2 * b_pad * (input_size * h1_dim + h1_dim * h2_dim + h2_dim)
    bytes_accessed = 4 * (
        b_pad * input_size + b_pad                       # x in, out
        + h1_dim * input_size + h1_dim                   # w1, b1
        + h2_dim * h1_dim + h2_dim                       # w2, b2
        + h2_dim + 1                                     # w3, b3
    )

    out = pl.pallas_call(
        kernel,
        out_shape=jax.ShapeDtypeStruct((1, b_pad), jnp.float32),
        grid=grid,
        in_specs=[
            pl.BlockSpec((tb, input_size), lambda i: (i, 0)),    # x: batch-tiled
            pl.BlockSpec((h1_dim, input_size), const2),           # w1
            pl.BlockSpec((h1_dim, 1), const2),                    # b1
            pl.BlockSpec((h2_dim, h1_dim), const2),               # w2
            pl.BlockSpec((h2_dim, 1), const2),                    # b2
            pl.BlockSpec((h2_dim, 1), const2),                    # w3 column
            pl.BlockSpec((1, 1), const2),                         # b3
        ],
        out_specs=pl.BlockSpec((1, tb), lambda i: (0, i)),         # lane-dense
        compiler_params=pltpu.CompilerParams(
            dimension_semantics=("parallel",),                     # 2 TCs on v7x
        ),
        cost_estimate=pl.CostEstimate(
            flops=flops, transcendentals=0, bytes_accessed=bytes_accessed),
    )(x, w1, b1, w2, b2, w3c, b3)

    # .squeeze(1) from the PyTorch forward + drop padded rows (reshape glue).
    return out.reshape(b_pad)[:B]


def init_params(key, input_size, hidden_size=64):
    """Deterministic init mimicking nn.Linear's U(-1/sqrt(fan_in), 1/sqrt(fan_in)),
    stored in PyTorch-native (out, in) / (out,) layout."""
    def linear(k, fan_in, fan_out):
        kw, kb = jax.random.split(k)
        bound = 1.0 / (float(fan_in) ** 0.5)
        w = jax.random.uniform(kw, (fan_out, fan_in), jnp.float32, -bound, bound)
        b = jax.random.uniform(kb, (fan_out,), jnp.float32, -bound, bound)
        return w, b

    k1, k2, k3 = jax.random.split(key, 3)
    w1, b1 = linear(k1, input_size, hidden_size)
    w2, b2 = linear(k2, hidden_size, hidden_size // 2)
    w3, b3 = linear(k3, hidden_size // 2, 1)
    return {"w1": w1, "b1": b1, "w2": w2, "b2": b2, "w3": w3, "b3": b3}


def reference_forward(x, p):
    h1 = jnp.maximum(x @ p["w1"].T + p["b1"], 0.0)
    h2 = jnp.maximum(h1 @ p["w2"].T + p["b2"], 0.0)
    return (h2 @ p["w3"].T + p["b3"])[:, 0]


if __name__ == "__main__":
    B, INPUT_SIZE, HIDDEN = 8, 16, 64

    key = jax.random.PRNGKey(0)
    kx, kp = jax.random.split(key)
    x = jax.random.normal(kx, (B, INPUT_SIZE), jnp.float32)
    params = init_params(kp, INPUT_SIZE, HIDDEN)

    y = jax.block_until_ready(simplenet_forward(x, params))
    y_ref = reference_forward(x, params)
    assert y.shape == (B,), y.shape
    assert jnp.allclose(y, y_ref, atol=1e-5, rtol=1e-5), (y, y_ref)

    # Batch not a multiple of the chunk/tile: exercises the padding path and a
    # 2-step (megacore-shardable) grid.
    B2 = 300
    x2 = jax.random.normal(jax.random.PRNGKey(1), (B2, INPUT_SIZE), jnp.float32)
    y2 = jax.block_until_ready(simplenet_forward(x2, params))
    assert y2.shape == (B2,), y2.shape
    assert jnp.allclose(y2, reference_forward(x2, params), atol=1e-5, rtol=1e-5)

    print("KERNEL_OK")
</pallas_src>

<mosaic_0001>
module attributes {stable_mosaic.version = 11 : i64} {
  func.func @kernel(%arg0: i32, %arg1: memref<256x16xf32, #tpu.memory_space<vmem>>, %arg2: memref<64x16xf32, #tpu.memory_space<vmem>>, %arg3: memref<64x1xf32, #tpu.memory_space<vmem>>, %arg4: memref<32x64xf32, #tpu.memory_space<vmem>>, %arg5: memref<32x1xf32, #tpu.memory_space<vmem>>, %arg6: memref<32x1xf32, #tpu.memory_space<vmem>>, %arg7: memref<1x1xf32, #tpu.memory_space<vmem>>, %arg8: memref<1x256xf32, #tpu.memory_space<vmem>>) attributes {dimension_semantics = [#tpu.dimension_semantics<parallel>], iteration_bounds = array<i64: 1>, scalar_prefetch = 0 : i64, scratch_operands = 0 : i64, tpu.core_type = #tpu.core_type<tc>, window_params = [{transform_indices = @transform_0, window_bounds = array<i64: 256, 16>}, {pipeline_mode = #tpu.pipeline_mode<synchronous>, transform_indices = @transform_1, window_bounds = array<i64: 64, 16>}, {pipeline_mode = #tpu.pipeline_mode<synchronous>, transform_indices = @transform_2, window_bounds = array<i64: 64, 1>}, {pipeline_mode = #tpu.pipeline_mode<synchronous>, transform_indices = @transform_3, window_bounds = array<i64: 32, 64>}, {pipeline_mode = #tpu.pipeline_mode<synchronous>, transform_indices = @transform_4, window_bounds = array<i64: 32, 1>}, {pipeline_mode = #tpu.pipeline_mode<synchronous>, transform_indices = @transform_5, window_bounds = array<i64: 32, 1>}, {pipeline_mode = #tpu.pipeline_mode<synchronous>, transform_indices = @transform_6, window_bounds = array<i64: 1, 1>}, {transform_indices = @transform_7, window_bounds = array<i64: 1, 256>}]} {
    %c0 = arith.constant 0 : index
    %c0_0 = arith.constant 0 : index
    %0 = vector.load %arg2[%c0, %c0_0] : memref<64x16xf32, #tpu.memory_space<vmem>>, vector<64x16xf32>
    %c0_1 = arith.constant 0 : index
    %c0_2 = arith.constant 0 : index
    %1 = vector.load %arg3[%c0_1, %c0_2] : memref<64x1xf32, #tpu.memory_space<vmem>>, vector<64x1xf32>
    %c0_3 = arith.constant 0 : index
    %c0_4 = arith.constant 0 : index
    %2 = vector.load %arg4[%c0_3, %c0_4] : memref<32x64xf32, #tpu.memory_space<vmem>>, vector<32x64xf32>
    %c0_5 = arith.constant 0 : index
    %c0_6 = arith.constant 0 : index
    %3 = vector.load %arg5[%c0_5, %c0_6] : memref<32x1xf32, #tpu.memory_space<vmem>>, vector<32x1xf32>
    %c0_7 = arith.constant 0 : index
    %c0_8 = arith.constant 0 : index
    %4 = vector.load %arg6[%c0_7, %c0_8] : memref<32x1xf32, #tpu.memory_space<vmem>>, vector<32x1xf32>
    %c0_9 = arith.constant 0 : index
    %c0_10 = arith.constant 0 : index
    %5 = vector.load %arg7[%c0_9, %c0_10] : memref<1x1xf32, #tpu.memory_space<vmem>>, vector<1x1xf32>
    %c0_i32 = arith.constant 0 : i32
    %c256_i32 = arith.constant 256 : i32
    %6 = arith.muli %c0_i32, %c256_i32 : i32
    %7 = tpu.assume_multiple %6, 256 : i32
    %8 = arith.index_cast %7 : i32 to index
    %c0_11 = arith.constant 0 : index
    %9 = vector.load %arg1[%8, %c0_11] : memref<256x16xf32, #tpu.memory_space<vmem>>, vector<256x16xf32>
    %cst = arith.constant dense<0.000000e+00> : vector<64x256xf32>
    %10 = tpu.matmul %0, %9, %cst {dimension_numbers = #tpu.dot_dimension_numbers<[1], [1], [0], [0], [0, 0, 1, 0], [], []>} : vector<64x16xf32>, vector<256x16xf32>, vector<64x256xf32> -> vector<64x256xf32>
    %11 = vector.broadcast %1 : vector<64x1xf32> to vector<64x256xf32>
    %12 = arith.addf %10, %11 : vector<64x256xf32>
    %cst_12 = arith.constant 0.000000e+00 : f32
    %13 = vector.broadcast %cst_12 : f32 to vector<64x256xf32>
    %14 = arith.maximumf %12, %13 : vector<64x256xf32>
    %cst_13 = arith.constant dense<0.000000e+00> : vector<32x256xf32>
    %15 = tpu.matmul %2, %14, %cst_13 {dimension_numbers = #tpu.dot_dimension_numbers<[1], [0], [0], [1], [0, 0, 1, 1], [], []>} : vector<32x64xf32>, vector<64x256xf32>, vector<32x256xf32> -> vector<32x256xf32>
    %16 = vector.broadcast %3 : vector<32x1xf32> to vector<32x256xf32>
    %17 = arith.addf %15, %16 : vector<32x256xf32>
    %cst_14 = arith.constant 0.000000e+00 : f32
    %18 = vector.broadcast %cst_14 : f32 to vector<32x256xf32>
    %19 = arith.maximumf %17, %18 : vector<32x256xf32>
    %20 = vector.broadcast %4 : vector<32x1xf32> to vector<32x256xf32>
    %21 = arith.mulf %19, %20 : vector<32x256xf32>
    %cst_15 = arith.constant dense<0.000000e+00> : vector<256xf32>
    %22 = vector.multi_reduction <add>, %21, %cst_15 [0] : vector<32x256xf32> to vector<256xf32>
    %23 = vector.shape_cast %22 : vector<256xf32> to vector<1x256xf32>
    %24 = vector.broadcast %5 : vector<1x1xf32> to vector<1x256xf32>
    %25 = arith.addf %23, %24 : vector<1x256xf32>
    %c0_16 = arith.constant 0 : index
    %26 = arith.index_cast %7 : i32 to index
    %27 = vector.load %arg8[%c0_16, %26] : memref<1x256xf32, #tpu.memory_space<vmem>>, vector<1x256xf32>
    tpu.vector_store %arg8[%c0_16, %26], %25 {strides = array<i32>} : memref<1x256xf32, #tpu.memory_space<vmem>>, vector<1x256xf32>,
    %c1_i32 = arith.constant 1 : i32
    return
  }
  func.func @transform_0(%arg0: i32) -> (i32, i32) {
    %c0_i32 = arith.constant 0 : i32
    %c0_i32_0 = arith.constant 0 : i32
    return %arg0, %c0_i32 : i32, i32
  }
  func.func @transform_1(%arg0: i32) -> (i32, i32) {
    %c0_i32 = arith.constant 0 : i32
    %c0_i32_0 = arith.constant 0 : i32
    %c0_i32_1 = arith.constant 0 : i32
    return %c0_i32, %c0_i32_0 : i32, i32
  }
  func.func @transform_2(%arg0: i32) -> (i32, i32) {
    %c0_i32 = arith.constant 0 : i32
    %c0_i32_0 = arith.constant 0 : i32
    %c0_i32_1 = arith.constant 0 : i32
    return %c0_i32, %c0_i32_0 : i32, i32
  }
  func.func @transform_3(%arg0: i32) -> (i32, i32) {
    %c0_i32 = arith.constant 0 : i32
    %c0_i32_0 = arith.constant 0 : i32
    %c0_i32_1 = arith.constant 0 : i32
    return %c0_i32, %c0_i32_0 : i32, i32
  }
  func.func @transform_4(%arg0: i32) -> (i32, i32) {
    %c0_i32 = arith.constant 0 : i32
    %c0_i32_0 = arith.constant 0 : i32
    %c0_i32_1 = arith.constant 0 : i32
    return %c0_i32, %c0_i32_0 : i32, i32
  }
  func.func @transform_5(%arg0: i32) -> (i32, i32) {
    %c0_i32 = arith.constant 0 : i32
    %c0_i32_0 = arith.constant 0 : i32
    %c0_i32_1 = arith.constant 0 : i32
    return %c0_i32, %c0_i32_0 : i32, i32
  }
  func.func @transform_6(%arg0: i32) -> (i32, i32) {
    %c0_i32 = arith.constant 0 : i32
    %c0_i32_0 = arith.constant 0 : i32
    %c0_i32_1 = arith.constant 0 : i32
    return %c0_i32, %c0_i32_0 : i32, i32
  }
  func.func @transform_7(%arg0: i32) -> (i32, i32) {
    %c0_i32 = arith.constant 0 : i32
    %c0_i32_0 = arith.constant 0 : i32
    return %c0_i32, %arg0 : i32, i32
  }
}

</mosaic_0001>

<llo_original>
// kernel: simplenet_forward.1
$region0: #{simplenet_forward.1}
  #allocation0 [shape = 'u32[]', space=smem, size = 0x4, offset = 0x4, fixed_abs, tag = 'smem constant byte address 0x4 - core index']
  #allocation1 [shape = 'u32[72,128]{1,0:T(1,128)}', space=vmem, size = 0x9000, scoped, tag = 'internal scratch']
  #allocation2 [shape = 'f32[1,1]{1,0:T(1,128)S(1)}', space=vmem, size = 0x200, scoped, tag = 'scoped memory for simplenet_forward.1']
  %s0 = inlined_call_operand.vmem [shape: f32[256,16], index: 0, kind: input, shape index: {}]
  %s1 = inlined_call_operand.vmem [shape: f32[64,16], index: 1, kind: input, shape index: {}]
  %s2 = inlined_call_operand.vmem [shape: f32[64,1], index: 2, kind: input, shape index: {}]
  %s3 = inlined_call_operand.vmem [shape: f32[32,64], index: 3, kind: input, shape index: {}]
  %s4 = inlined_call_operand.vmem [shape: f32[32,1], index: 4, kind: input, shape index: {}]
  %s5 = inlined_call_operand.vmem [shape: f32[32,1], index: 5, kind: input, shape index: {}]
  %s6 = inlined_call_operand.<no memory space> [shape: f32[1,1], index: 6, kind: input, shape index: {}]
  %s7 = inlined_call_operand.vmem [shape: f32[1,256], index: 7, kind: output, shape index: {}]
  %s8 = sld [smem:[#allocation0]]
  $region38: #{simplenet_forward.1} parent=0
    _
  %s10 = ssub.s32 1, %s8
  %s11 = scalar_select 0, %s10, %s8
  %v12 = vstv %s6
  %13 = vst [vmem:[#allocation2] sm:$0x1] %v12
  // Predicated region
  $region2: #{simplenet_forward.1} parent=0 // pred_check
    _
  $region3: #{simplenet_forward.1} parent=0 // pred_check_branch
    %15 = sbr.rel (0) target = $region5
  $region4: #{simplenet_forward.1} parent=0 // pred_region
    _
  $region5: #{simplenet_forward.1} parent=0 // pred_fallthru
    _
  // Predicated region
  $region6: #{simplenet_forward.1} parent=0 // pred_check
    _
  $region7: #{simplenet_forward.1} parent=0 // pred_check_branch
    %17 = sbr.rel (0) target = $region9
  $region8: #{simplenet_forward.1} parent=0 // pred_region
    _
  $region9: #{simplenet_forward.1} parent=0 // pred_fallthru
    _
  // Predicated region
  $region10: #{simplenet_forward.1} parent=0 // pred_check
    _
  $region11: #{simplenet_forward.1} parent=0 // pred_check_branch
    %19 = sbr.rel (0) target = $region13
  $region12: #{simplenet_forward.1} parent=0 // pred_region
    _
  $region13: #{simplenet_forward.1} parent=0 // pred_fallthru
    _
  // Predicated region
  $region14: #{simplenet_forward.1} parent=0 // pred_check
    _
  $region15: #{simplenet_forward.1} parent=0 // pred_check_branch
    %21 = sbr.rel (0) target = $region17
  $region16: #{simplenet_forward.1} parent=0 // pred_region
    _
  $region17: #{simplenet_forward.1} parent=0 // pred_fallthru
    _
  // Predicated region
  $region18: #{simplenet_forward.1} parent=0 // pred_check
    _
  $region19: #{simplenet_forward.1} parent=0 // pred_check_branch
    %23 = sbr.rel (0) target = $region21
  $region20: #{simplenet_forward.1} parent=0 // pred_region
    _
  $region21: #{simplenet_forward.1} parent=0 // pred_fallthru
    _
  // Predicated region
  $region22: #{simplenet_forward.1} parent=0 // pred_check
    _
  $region23: #{simplenet_forward.1} parent=0 // pred_check_branch
    %25 = sbr.rel (0) target = $region25
  $region24: #{simplenet_forward.1} parent=0 // pred_region
    _
  $region25: #{simplenet_forward.1} parent=0 // pred_fallthru
    _
  // Predicated region
  $region26: #{simplenet_forward.1} parent=0 // pred_check
    _
  $region27: #{simplenet_forward.1} parent=0 // pred_check_branch
    %27 = sbr.rel (0) target = $region29
  $region28: #{simplenet_forward.1} parent=0 // pred_region
    _
  $region29: #{simplenet_forward.1} parent=0 // pred_fallthru
    _
  %v28 = vld [vmem:[%s1] sm:$0xff]
  %v29 = vld [vmem:[%s1 + $0x8] sm:$0xff]
  %v30 = vld [vmem:[%s1 + $0x10] sm:$0xff]
  %v31 = vld [vmem:[%s1 + $0x18] sm:$0xff]
  %v32 = vld [vmem:[%s1 + $0x20] sm:$0xff]
  %v33 = vld [vmem:[%s1 + $0x28] sm:$0xff]
  %v34 = vld [vmem:[%s1 + $0x30] sm:$0xff]
  %v35 = vld [vmem:[%s1 + $0x38] sm:$0xff]
  %v36 = vld [vmem:[%s2] sm:$0xff]
  %v37 = vld [vmem:[%s2 + $0x8] sm:$0xff]
  %v38 = vld [vmem:[%s2 + $0x10] sm:$0xff]
  %v39 = vld [vmem:[%s2 + $0x18] sm:$0xff]
  %v40 = vld [vmem:[%s2 + $0x20] sm:$0xff]
  %v41 = vld [vmem:[%s2 + $0x28] sm:$0xff]
  %v42 = vld [vmem:[%s2 + $0x30] sm:$0xff]
  %v43 = vld [vmem:[%s2 + $0x38] sm:$0xff]
  %v44 = vld [vmem:[%s3] sm:$0xff]
  %v45 = vld [vmem:[%s3 + $0x8] sm:$0xff]
  %v46 = vld [vmem:[%s3 + $0x10] sm:$0xff]
  %v47 = vld [vmem:[%s3 + $0x18] sm:$0xff]
  %v48 = vld [vmem:[%s4] sm:$0xff]
  %v49 = vld [vmem:[%s4 + $0x8] sm:$0xff]
  %v50 = vld [vmem:[%s4 + $0x10] sm:$0xff]
  %v51 = vld [vmem:[%s4 + $0x18] sm:$0xff]
  %v52 = vld [vmem:[%s5] sm:$0xff]
  %v53 = vld [vmem:[%s5 + $0x8] sm:$0xff]
  %v54 = vld [vmem:[%s5 + $0x10] sm:$0xff]
  %v55 = vld [vmem:[%s5 + $0x18] sm:$0xff]
  %v56 = vld [vmem:[#allocation2] sm:$0x1]
  %v57 = vld [vmem:[%s0] sm:$0xff]
  %v58 = vld [vmem:[%s0 + $0x8] sm:$0xff]
  %v59 = vld [vmem:[%s0 + $0x10] sm:$0xff]
  %v60 = vld [vmem:[%s0 + $0x18] sm:$0xff]
  %v61 = vld [vmem:[%s0 + $0x20] sm:$0xff]
  %v62 = vld [vmem:[%s0 + $0x28] sm:$0xff]
  %v63 = vld [vmem:[%s0 + $0x30] sm:$0xff]
  %v64 = vld [vmem:[%s0 + $0x38] sm:$0xff]
  %v65 = vld [vmem:[%s0 + $0x40] sm:$0xff]
  %v66 = vld [vmem:[%s0 + $0x48] sm:$0xff]
  %v67 = vld [vmem:[%s0 + $0x50] sm:$0xff]
  %v68 = vld [vmem:[%s0 + $0x58] sm:$0xff]
  %v69 = vld [vmem:[%s0 + $0x60] sm:$0xff]
  %v70 = vld [vmem:[%s0 + $0x68] sm:$0xff]
  %v71 = vld [vmem:[%s0 + $0x70] sm:$0xff]
  %v72 = vld [vmem:[%s0 + $0x78] sm:$0xff]
  %v73 = vld [vmem:[%s0 + $0x80] sm:$0xff]
  %v74 = vld [vmem:[%s0 + $0x88] sm:$0xff]
  %v75 = vld [vmem:[%s0 + $0x90] sm:$0xff]
  %v76 = vld [vmem:[%s0 + $0x98] sm:$0xff]
  %v77 = vld [vmem:[%s0 + $0xa0] sm:$0xff]
  %v78 = vld [vmem:[%s0 + $0xa8] sm:$0xff]
  %v79 = vld [vmem:[%s0 + $0xb0] sm:$0xff]
  %v80 = vld [vmem:[%s0 + $0xb8] sm:$0xff]
  %v81 = vld [vmem:[%s0 + $0xc0] sm:$0xff]
  %v82 = vld [vmem:[%s0 + $0xc8] sm:$0xff]
  %v83 = vld [vmem:[%s0 + $0xd0] sm:$0xff]
  %v84 = vld [vmem:[%s0 + $0xd8] sm:$0xff]
  %v85 = vld [vmem:[%s0 + $0xe0] sm:$0xff]
  %v86 = vld [vmem:[%s0 + $0xe8] sm:$0xff]
  %v87 = vld [vmem:[%s0 + $0xf0] sm:$0xff]
  %v88 = vld [vmem:[%s0 + $0xf8] sm:$0xff]
  %90 = vset.pattern.permute.xlu0 0
  %91 = vperm.xlu0 %90, %v36
  %v92 = vpop.permute.xlu0 %91
  %95 = vset.pattern.permute.xlu0 0
  %96 = vperm.xlu0 %95, %v37
  %v97 = vpop.permute.xlu0 %96
  %100 = vset.pattern.permute.xlu0 0
  %101 = vperm.xlu0 %100, %v38
  %v102 = vpop.permute.xlu0 %101
  %105 = vset.pattern.permute.xlu0 0
  %106 = vperm.xlu0 %105, %v39
  %v107 = vpop.permute.xlu0 %106
  %110 = vset.pattern.permute.xlu0 0
  %111 = vperm.xlu0 %110, %v40
  %v112 = vpop.permute.xlu0 %111
  %115 = vset.pattern.permute.xlu0 0
  %116 = vperm.xlu0 %115, %v41
  %v117 = vpop.permute.xlu0 %116
  %120 = vset.pattern.permute.xlu0 0
  %121 = vperm.xlu0 %120, %v42
  %v122 = vpop.permute.xlu0 %121
  %125 = vset.pattern.permute.xlu0 0
  %126 = vperm.xlu0 %125, %v43
  %v127 = vpop.permute.xlu0 %126
  %vm129 = vcmask 130048
  %v131 = vsel %vm129, %v28, 0
  %v134 = vsel %vm129, %v29, 0
  %v137 = vsel %vm129, %v30, 0
  %v140 = vsel %vm129, %v31, 0
  %v143 = vsel %vm129, %v32, 0
  %v146 = vsel %vm129, %v33, 0
  %v149 = vsel %vm129, %v34, 0
  %v152 = vsel %vm129, %v35, 0
  %v155 = vsel %vm129, %v57, 0
  %v158 = vsel %vm129, %v58, 0
  %v161 = vsel %vm129, %v59, 0
  %v164 = vsel %vm129, %v60, 0
  %v167 = vsel %vm129, %v61, 0
  %v170 = vsel %vm129, %v62, 0
  %v173 = vsel %vm129, %v63, 0
  %v176 = vsel %vm129, %v64, 0
  %v179 = vsel %vm129, %v65, 0
  %v182 = vsel %vm129, %v66, 0
  %v185 = vsel %vm129, %v67, 0
  %v188 = vsel %vm129, %v68, 0
  %v191 = vsel %vm129, %v69, 0
  %v194 = vsel %vm129, %v70, 0
  %v197 = vsel %vm129, %v71, 0
  %v200 = vsel %vm129, %v72, 0
  %v203 = vsel %vm129, %v73, 0
  %v206 = vsel %vm129, %v74, 0
  %v209 = vsel %vm129, %v75, 0
  %v212 = vsel %vm129, %v76, 0
  %v215 = vsel %vm129, %v77, 0
  %v218 = vsel %vm129, %v78, 0
  %v221 = vsel %vm129, %v79, 0
  %v224 = vsel %vm129, %v80, 0
  %v227 = vsel %vm129, %v81, 0
  %v230 = vsel %vm129, %v82, 0
  %v233 = vsel %vm129, %v83, 0
  %v236 = vsel %vm129, %v84, 0
  %v239 = vsel %vm129, %v85, 0
  %v242 = vsel %vm129, %v86, 0
  %v245 = vsel %vm129, %v87, 0
  %v248 = vsel %vm129, %v88, 0
  %250 = vmatpush.xpose.msra.mxu0 %v200
  %251 = vmatpush.xpose.msra.mxu0 %v197
  %252 = vmatpush.xpose.msra.mxu0 %v194
  %253 = vmatpush.xpose.msra.mxu0 %v191
  %254 = vmatpush.xpose.msra.mxu0 %v188
  %255 = vmatpush.xpose.msra.mxu0 %v185
  %256 = vmatpush.xpose.msra.mxu0 %v182
  %257 = vmatpush.xpose.msra.mxu0 %v179
  %258 = vmatpush.xpose.msra.mxu0 %v176
  %259 = vmatpush.xpose.msra.mxu0 %v173
  %260 = vmatpush.xpose.msra.mxu0 %v170
  %261 = vmatpush.xpose.msra.mxu0 %v167
  %262 = vmatpush.xpose.msra.mxu0 %v164
  %263 = vmatpush.xpose.msra.mxu0 %v161
  %264 = vmatpush.xpose.msra.mxu0 %v158
  %265 = vmatpush.xpose.msra.mxu0 %v155
  %266 = vmatmul.f32.gmra.mxu0 %v131
  %v267 = vpop.f32.mrf.mxu0
  %v268 = vadd.f32 %v92, %v267
  %269 = vmatmul.f32.gmra.mxu0 %v134
  %v270 = vpop.f32.mrf.mxu0
  %v271 = vadd.f32 %v97, %v270
  %272 = vmatmul.f32.gmra.mxu0 %v137
  %v273 = vpop.f32.mrf.mxu0
  %v274 = vadd.f32 %v102, %v273
  %275 = vmatmul.f32.gmra.mxu0 %v140
  %v276 = vpop.f32.mrf.mxu0
  %v277 = vadd.f32 %v107, %v276
  %278 = vmatmul.f32.gmra.mxu0 %v143
  %v279 = vpop.f32.mrf.mxu0
  %v280 = vadd.f32 %v112, %v279
  %281 = vmatmul.f32.gmra.mxu0 %v146
  %v282 = vpop.f32.mrf.mxu0
  %v283 = vadd.f32 %v117, %v282
  %284 = vmatmul.f32.gmra.mxu0 %v149
  %v285 = vpop.f32.mrf.mxu0
  %v286 = vadd.f32 %v122, %v285
  %287 = vmatmul.f32.gmra.mxu0 %v152
  %v288 = vpop.f32.mrf.mxu0
  %v289 = vadd.f32 %v127, %v288
  %290 = vdwg.mxu0
  %291 = vmatpush.xpose.msra.mxu0 %v248
  %292 = vmatpush.xpose.msra.mxu0 %v245
  %293 = vmatpush.xpose.msra.mxu0 %v242
  %294 = vmatpush.xpose.msra.mxu0 %v239
  %295 = vmatpush.xpose.msra.mxu0 %v236
  %296 = vmatpush.xpose.msra.mxu0 %v233
  %297 = vmatpush.xpose.msra.mxu0 %v230
  %298 = vmatpush.xpose.msra.mxu0 %v227
  %299 = vmatpush.xpose.msra.mxu0 %v224
  %300 = vmatpush.xpose.msra.mxu0 %v221
  %301 = vmatpush.xpose.msra.mxu0 %v218
  %302 = vmatpush.xpose.msra.mxu0 %v215
  %303 = vmatpush.xpose.msra.mxu0 %v212
  %304 = vmatpush.xpose.msra.mxu0 %v209
  %305 = vmatpush.xpose.msra.mxu0 %v206
  %306 = vmatpush.xpose.msra.mxu0 %v203
  %307 = vmatmul.f32.gmra.mxu0 %v131
  %v308 = vpop.f32.mrf.mxu0
  %v309 = vadd.f32 %v92, %v308
  %310 = vmatmul.f32.gmra.mxu0 %v134
  %v311 = vpop.f32.mrf.mxu0
  %v312 = vadd.f32 %v97, %v311
  %313 = vmatmul.f32.gmra.mxu0 %v137
  %v314 = vpop.f32.mrf.mxu0
  %v315 = vadd.f32 %v102, %v314
  %316 = vmatmul.f32.gmra.mxu0 %v140
  %v317 = vpop.f32.mrf.mxu0
  %v318 = vadd.f32 %v107, %v317
  %319 = vmatmul.f32.gmra.mxu0 %v143
  %v320 = vpop.f32.mrf.mxu0
  %v321 = vadd.f32 %v112, %v320
  %322 = vmatmul.f32.gmra.mxu0 %v146
  %v323 = vpop.f32.mrf.mxu0
  %v324 = vadd.f32 %v117, %v323
  %325 = vmatmul.f32.gmra.mxu0 %v149
  %v326 = vpop.f32.mrf.mxu0
  %v327 = vadd.f32 %v122, %v326
  %328 = vmatmul.f32.gmra.mxu0 %v152
  %v329 = vpop.f32.mrf.mxu0
  %v330 = vadd.f32 %v127, %v329
  %331 = vdwg.mxu0
  %v332 = vmax.f32 %v268, 0.0
  %v333 = vmax.f32 %v309, 0.0
  %v334 = vmax.f32 %v271, 0.0
  %v335 = vmax.f32 %v312, 0.0
  %v336 = vmax.f32 %v274, 0.0
  %v337 = vmax.f32 %v315, 0.0
  %v338 = vmax.f32 %v277, 0.0
  %v339 = vmax.f32 %v318, 0.0
  %v340 = vmax.f32 %v280, 0.0
  %v341 = vmax.f32 %v321, 0.0
  %v342 = vmax.f32 %v283, 0.0
  %v343 = vmax.f32 %v324, 0.0
  %v344 = vmax.f32 %v286, 0.0
  %v345 = vmax.f32 %v327, 0.0
  %v346 = vmax.f32 %v289, 0.0
  %v347 = vmax.f32 %v330, 0.0
  %349 = vset.pattern.permute.xlu0 0
  %350 = vperm.xlu0 %349, %v48
  %v351 = vpop.permute.xlu0 %350
  %354 = vset.pattern.permute.xlu0 0
  %355 = vperm.xlu0 %354, %v49
  %v356 = vpop.permute.xlu0 %355
  %359 = vset.pattern.permute.xlu0 0
  %360 = vperm.xlu0 %359, %v50
  %v361 = vpop.permute.xlu0 %360
  %364 = vset.pattern.permute.xlu0 0
  %365 = vperm.xlu0 %364, %v51
  %v366 = vpop.permute.xlu0 %365
  %vm368 = vcmask 523264
  %v370 = vsel %vm368, %v44, 0
  %v373 = vsel %vm368, %v45, 0
  %v376 = vsel %vm368, %v46, 0
  %v379 = vsel %vm368, %v47, 0
  %381 = vmatpush.msra.mxu0 0.0
  %382 = vmatpush.msra.mxu0 0.0
  %383 = vmatpush.msra.mxu0 0.0
  %384 = vmatpush.msra.mxu0 0.0
  %385 = vmatpush.msra.mxu0 0.0
  %386 = vmatpush.msra.mxu0 0.0
  %387 = vmatpush.msra.mxu0 0.0
  %388 = vmatpush.msra.mxu0 0.0
  %389 = vmatpush.msra.mxu0 %v346
  %390 = vmatpush.msra.mxu0 %v344
  %391 = vmatpush.msra.mxu0 %v342
  %392 = vmatpush.msra.mxu0 %v340
  %393 = vmatpush.msra.mxu0 %v338
  %394 = vmatpush.msra.mxu0 %v336
  %395 = vmatpush.msra.mxu0 %v334
  %396 = vmatpush.msra.mxu0 %v332
  %397 = vmatmul.f32.gmra.mxu0 %v370
  %v398 = vpop.f32.mrf.mxu0
  %v399 = vadd.f32 %v351, %v398
  %400 = vmatmul.f32.gmra.mxu0 %v373
  %v401 = vpop.f32.mrf.mxu0
  %v402 = vadd.f32 %v356, %v401
  %403 = vmatmul.f32.gmra.mxu0 %v376
  %v404 = vpop.f32.mrf.mxu0
  %v405 = vadd.f32 %v361, %v404
  %406 = vmatmul.f32.gmra.mxu0 %v379
  %v407 = vpop.f32.mrf.mxu0
  %v408 = vadd.f32 %v366, %v407
  %409 = vdwg.mxu0
  %410 = vmatpush.msra.mxu0 0.0
  %411 = vmatpush.msra.mxu0 0.0
  %412 = vmatpush.msra.mxu0 0.0
  %413 = vmatpush.msra.mxu0 0.0
  %414 = vmatpush.msra.mxu0 0.0
  %415 = vmatpush.msra.mxu0 0.0
  %416 = vmatpush.msra.mxu0 0.0
  %417 = vmatpush.msra.mxu0 0.0
  %418 = vmatpush.msra.mxu0 %v347
  %419 = vmatpush.msra.mxu0 %v345
  %420 = vmatpush.msra.mxu0 %v343
  %421 = vmatpush.msra.mxu0 %v341
  %422 = vmatpush.msra.mxu0 %v339
  %423 = vmatpush.msra.mxu0 %v337
  %424 = vmatpush.msra.mxu0 %v335
  %425 = vmatpush.msra.mxu0 %v333
  %426 = vmatmul.f32.gmra.mxu0 %v370
  %v427 = vpop.f32.mrf.mxu0
  %v428 = vadd.f32 %v351, %v427
  %429 = vmatmul.f32.gmra.mxu0 %v373
  %v430 = vpop.f32.mrf.mxu0
  %v431 = vadd.f32 %v356, %v430
  %432 = vmatmul.f32.gmra.mxu0 %v376
  %v433 = vpop.f32.mrf.mxu0
  %v434 = vadd.f32 %v361, %v433
  %435 = vmatmul.f32.gmra.mxu0 %v379
  %v436 = vpop.f32.mrf.mxu0
  %v437 = vadd.f32 %v366, %v436
  %438 = vdwg.mxu0
  %v439 = vmax.f32 %v399, 0.0
  %v440 = vmax.f32 %v428, 0.0
  %v441 = vmax.f32 %v402, 0.0
  %v442 = vmax.f32 %v431, 0.0
  %v443 = vmax.f32 %v405, 0.0
  %v444 = vmax.f32 %v434, 0.0
  %v445 = vmax.f32 %v408, 0.0
  %v446 = vmax.f32 %v437, 0.0
  %448 = vset.pattern.permute.xlu0 0
  %449 = vperm.xlu0 %448, %v52
  %v450 = vpop.permute.xlu0 %449
  %453 = vset.pattern.permute.xlu0 0
  %454 = vperm.xlu0 %453, %v53
  %v455 = vpop.permute.xlu0 %454
  %458 = vset.pattern.permute.xlu0 0
  %459 = vperm.xlu0 %458, %v54
  %v460 = vpop.permute.xlu0 %459
  %463 = vset.pattern.permute.xlu0 0
  %464 = vperm.xlu0 %463, %v55
  %v465 = vpop.permute.xlu0 %464
  %v467 = vmul.f32 %v439, %v450
  %v468 = vmul.f32 %v440, %v450
  %v469 = vmul.f32 %v441, %v455
  %v470 = vmul.f32 %v442, %v455
  %v471 = vmul.f32 %v443, %v460
  %v472 = vmul.f32 %v444, %v460
  %v473 = vmul.f32 %v445, %v465
  %v474 = vmul.f32 %v446, %v465
  %v475 = vadd.f32 %v467, %v469
  %v476 = vadd.f32 %v475, %v471
  %v477 = vadd.f32 %v476, %v473
  %v478 = vrot.slane %v477, 4
  %v479 = vadd.f32 %v477, %v478
  %v480 = vrot.slane %v479, 2
  %v481 = vadd.f32 %v479, %v480
  %v482 = vrot.slane %v481, 1
  %v483 = vadd.f32 %v481, %v482
  %v484 = vadd.f32 %v468, %v470
  %v485 = vadd.f32 %v484, %v472
  %v486 = vadd.f32 %v485, %v474
  %v487 = vrot.slane %v486, 4
  %v488 = vadd.f32 %v486, %v487
  %v489 = vrot.slane %v488, 2
  %v490 = vadd.f32 %v488, %v489
  %v491 = vrot.slane %v490, 1
  %v492 = vadd.f32 %v490, %v491
  %494 = vset.pattern.permute.xlu0 0
  %495 = vperm.xlu0 %494, %v56
  %v496 = vpop.permute.xlu0 %495
  %v498 = vperm.slane %v496, 0
  %v499 = vadd.f32 %v483, %v498
  %v500 = vadd.f32 %v492, %v498
  %v503 = vrot.slane %v500, 7
  %vm504 = vcmask 1040384
  %v505 = vsel %vm504, %v499, %v503
  %v507 = vlaneseq
  %vm508 = vcmp.ge.s32.totalorder %v507, 0
  %vm509 = vcmp.lt.s32.totalorder %v507, 256
  %vm510 = vmand %vm508, %vm509
  %511 = vst.msk [vmem:[%s7] sm:$0x3] %vm510, %v505
  // Predicated region
  $region30: #{simplenet_forward.1} parent=0 // pred_check
    _
  $region31: #{simplenet_forward.1} parent=0 // pred_check_branch
    %513 = sbr.rel (0) target = $region33
  $region32: #{simplenet_forward.1} parent=0 // pred_region
    _
  $region33: #{simplenet_forward.1} parent=0 // pred_fallthru
    _
  // Predicated region
  $region34: #{simplenet_forward.1} parent=0 // pred_check
    _
  $region35: #{simplenet_forward.1} parent=0 // pred_check_branch
    %515 = sbr.rel (0) target = $region37
  $region36: #{simplenet_forward.1} parent=0 // pred_region
    _
  $region37: #{simplenet_forward.1} parent=0 // pred_fallthru
    _

</llo_original>
